<compile_context>
chip_gen: v7x
topology: tpu7x:2x2x1
jax: 0.10.0
libtpu: 0.0.40
codegen_flags: <defaults>
</compile_context>

<pallas_src>
import functools

import numpy as np
import jax
import jax.numpy as jnp
from jax.experimental import pallas as pl
from jax.experimental.pallas import tpu as pltpu

_N_LAYERS = 5   # after folding L3->L4 and L6->L7
_D = 128        # lane width used for every layer


def _cdiv(a, b):
    return -(-a // b)


def _round_up(x, m):
    return _cdiv(x, m) * m


def _agent_mlp_kernel(x_ref, w_ref, b_ref, out_ref):
    """Fused 5-layer (folded) block-diagonal MLP. ReLU after layers 0..3, last linear.

    x_ref  : [TB, 128]     bf16  packed input (PACK batch elements per row)
    w_ref  : [5*128, 128]  bf16  packed block-diagonal weight slab
    b_ref  : [8, 128]      f32   packed bias slab (row i = layer i bias)
    out_ref: [TB, 128]     f32   lane-dense packed logits
    """
    h = x_ref[...]                                      # bf16
    for i in range(_N_LAYERS):                          # static unroll, 5 layers
        w = w_ref[pl.ds(i * _D, _D), :]                 # static 128x128 bf16 view
        acc = jnp.dot(h, w, preferred_element_type=jnp.float32)   # MXU, f32 acc
        acc = acc + b_ref[pl.ds(i, 1), :]               # f32 bias, broadcast over rows
        if i < _N_LAYERS - 1:
            h = jnp.maximum(acc, 0.0).astype(jnp.bfloat16)        # ReLU, bf16 h
        else:
            out_ref[...] = acc.astype(out_ref.dtype)


def fold_and_pack_params(params):
    """params: list of 7 (W, b), W:[in,out], b:[1,out] (y = x @ W + b, i.e. W = W_torch.T).

    Folds the activation-free layers (L3 into L4, L6 into L7) exactly (float64),
    then packs every fused layer block-diagonally (PACK copies, GROUP lanes each)
    into a bf16 weight slab [5*128,128] and an f32 bias slab [8,128].
    Returns (w_slab, b_slab, pack, group, num_acts).
    """
    ps = [(np.asarray(w, np.float64), np.asarray(b, np.float64).reshape(1, -1))
          for w, b in params]
    (w1, b1), (w2, b2), (w3, b3), (w4, b4), (w5, b5), (w6, b6), (w7, b7) = ps

    w34 = w3 @ w4
    b34 = b3 @ w4 + b4
    w67 = w6 @ w7
    b67 = b6 @ w7 + b7
    fused = [(w1, b1), (w2, b2), (w34, b34), (w5, b5), (w67, b67)]

    max_dim = max(max(w.shape[0], w.shape[1]) for w, _ in fused)
    assert max_dim <= _D, "layer dims must be <= 128 for this packing"
    group = 32 if max_dim <= 32 else (64 if max_dim <= 64 else 128)
    pack = _D // group   # batch elements per 128-lane row (4 for the default dims)

    w_slab = np.zeros((_N_LAYERS * _D, _D), np.float32)
    b_slab = np.zeros((8, _D), np.float32)
    for i, (w, b) in enumerate(fused):
        din, dout = w.shape
        for g in range(pack):   # block-diagonal replication: exact (only zeros added)
            w_slab[i * _D + g * group: i * _D + g * group + din,
                   g * group: g * group + dout] = w.astype(np.float32)
            b_slab[i, g * group: g * group + dout] = b.reshape(-1).astype(np.float32)

    num_acts = ps[-1][0].shape[1]
    return (jnp.asarray(w_slab).astype(jnp.bfloat16),
            jnp.asarray(b_slab, jnp.float32),
            pack, group, num_acts)


@functools.partial(jax.jit,
                   static_argnames=("num_acts", "pack", "group", "block_rows"))
def agent_network_fc_forward(x, w_slab, b_slab, *, num_acts, pack, group,
                             block_rows=512):
    """x: [batch, obs_dim+obs_u_dim] f32; slabs/pack/group from fold_and_pack_params.

    block_rows = max packed rows per grid step (512 packed rows = 2048 batch elems
    at pack=4), chosen to amortize per-grid-step overhead while staying tiny in VMEM.
    """
    batch, feat = x.shape
    assert feat <= group

    rows = _cdiv(batch, pack)                       # packed rows needed
    steps = max(2, _cdiv(rows, block_rows))         # >=2 grid steps (v7x: both TCs work)
    tb = max(8, _round_up(_cdiv(rows, steps), 8))   # row tile, multiple of 8 sublanes
    rows_pad = _round_up(rows, tb)
    batch_pad = rows_pad * pack

    # Fold the feature pad into the block-diagonal repack: pad each element to `group`
    # lanes, pack `pack` elements per 128-lane row, cast to bf16 (halves input DMA).
    xp = jnp.pad(x, ((0, batch_pad - batch), (0, group - feat))).astype(jnp.bfloat16)
    xp = xp.reshape(rows_pad, pack * group)         # [rows_pad, 128]

    flops = 2 * rows_pad * _D * _D * _N_LAYERS
    bytes_accessed = (rows_pad * _D * 2            # packed bf16 input
                      + rows_pad * _D * 4          # f32 output
                      + _N_LAYERS * _D * _D * 2    # bf16 weight slab
                      + 8 * _D * 4)                # f32 bias slab

    out = pl.pallas_call(
        _agent_mlp_kernel,
        out_shape=jax.ShapeDtypeStruct((rows_pad, _D), jnp.float32),
        grid=(rows_pad // tb,),
        in_specs=[
            pl.BlockSpec((tb, _D), lambda i: (i, 0)),                # x: tiled over batch
            pl.BlockSpec((_N_LAYERS * _D, _D), lambda i: (0, 0)),    # weights: VMEM-resident
            pl.BlockSpec((8, _D), lambda i: (0, 0)),                 # biases: VMEM-resident
        ],
        out_specs=pl.BlockSpec((tb, _D), lambda i: (i, 0)),
        compiler_params=pltpu.CompilerParams(
            dimension_semantics=("parallel",)),      # v7x: shard batch across 2 TCs
        cost_estimate=pl.CostEstimate(flops=flops, transcendentals=0,
                                      bytes_accessed=bytes_accessed),
    )(xp, w_slab, b_slab)

    # Unpack: each 128-lane row holds `pack` elements' group-padded logits.
    out = out.reshape(rows_pad * pack, group)
    return out[:batch, :num_acts]


def make_params(key, dims):
    """Deterministic synthetic init; dims = [d0, d1, ..., dL]. W:[in,out], b:[1,out]."""
    params = []
    for i in range(len(dims) - 1):
        key, kw, kb = jax.random.split(key, 3)
        fan_in = dims[i]
        scale = 1.0 / jnp.sqrt(jnp.float32(fan_in))
        w = jax.random.uniform(kw, (dims[i], dims[i + 1]), jnp.float32, -scale, scale)
        b = jax.random.uniform(kb, (1, dims[i + 1]), jnp.float32, -scale, scale)
        params.append((w, b))
    return params


def reference_forward(x, params):
    """Plain-JAX f32 reference matching the original (unfolded) 7-layer module."""
    relu_after = {0, 1, 3, 4}  # ReLU after layers 1,2,4,5 (0-indexed); 2,5,6 linear
    h = x
    for i, (w, b) in enumerate(params):
        h = h @ w + b
        if i in relu_after:
            h = jnp.maximum(h, 0.0)
    return h


if __name__ == "__main__":
    # Small dims consistent with the module.
    obs_dim, obs_u_dim = 12, 4
    mid_dim1, mid_dim2 = 32, 32
    gnn_hdim1, gnn_hdim2, gnn_out_dim = 32, 32, 32
    num_acts = 8

    dims = [obs_dim + obs_u_dim, mid_dim1, mid_dim2, mid_dim2,
            gnn_hdim1, gnn_hdim2, gnn_out_dim, num_acts]

    key = jax.random.PRNGKey(0)
    key, kx1, kx2 = jax.random.split(key, 3)
    params = make_params(key, dims)
    w_slab, b_slab, pack, group, n_acts = fold_and_pack_params(params)

    # Tolerance is 2e-2: bf16 MXU operands (f32 accumulation); the layer folding and
    # block-diagonal zero-padding are exact.
    ATOL = 2e-2

    # Test 1: tiny, non-aligned batch (exercises batch padding / partial packed row).
    batch1 = 20
    x1 = jax.random.normal(kx1, (batch1, obs_dim + obs_u_dim), jnp.float32)
    out1 = agent_network_fc_forward(x1, w_slab, b_slab, num_acts=n_acts,
                                    pack=pack, group=group, block_rows=8)
    out1 = jax.block_until_ready(out1)
    ref1 = reference_forward(x1, params)
    assert out1.shape == (batch1, num_acts)
    assert jnp.allclose(out1, ref1, atol=ATOL, rtol=ATOL), "mismatch vs reference (t1)"

    # Test 2: larger batch with the default tile -> multi-step "parallel" grid.
    batch2 = 200
    x2 = jax.random.normal(kx2, (batch2, obs_dim + obs_u_dim), jnp.float32)
    out2 = agent_network_fc_forward(x2, w_slab, b_slab, num_acts=n_acts,
                                    pack=pack, group=group)
    out2 = jax.block_until_ready(out2)
    ref2 = reference_forward(x2, params)
    assert out2.shape == (batch2, num_acts)
    assert jnp.allclose(out2, ref2, atol=ATOL, rtol=ATOL), "mismatch vs reference (t2)"

    print("KERNEL_OK")
</pallas_src>

<mosaic_0001>
module attributes {stable_mosaic.version = 11 : i64} {
  func.func @_agent_mlp_kernel(%arg0: i32, %arg1: memref<8x128xbf16, #tpu.memory_space<vmem>>, %arg2: memref<640x128xbf16, #tpu.memory_space<vmem>>, %arg3: memref<8x128xf32, #tpu.memory_space<vmem>>, %arg4: memref<8x128xf32, #tpu.memory_space<vmem>>) attributes {dimension_semantics = [#tpu.dimension_semantics<parallel>], iteration_bounds = array<i64: 1>, scalar_prefetch = 0 : i64, scratch_operands = 0 : i64, tpu.core_type = #tpu.core_type<tc>, window_params = [{transform_indices = @transform_0, window_bounds = array<i64: 8, 128>}, {pipeline_mode = #tpu.pipeline_mode<synchronous>, transform_indices = @transform_1, window_bounds = array<i64: 640, 128>}, {pipeline_mode = #tpu.pipeline_mode<synchronous>, transform_indices = @transform_2, window_bounds = array<i64: 8, 128>}, {transform_indices = @transform_3, window_bounds = array<i64: 8, 128>}]} {
    %c0 = arith.constant 0 : index
    %c0_0 = arith.constant 0 : index
    %0 = vector.load %arg1[%c0, %c0_0] : memref<8x128xbf16, #tpu.memory_space<vmem>>, vector<8x128xbf16>
    %c0_1 = arith.constant 0 : index
    %c0_2 = arith.constant 0 : index
    %1 = vector.load %arg2[%c0_1, %c0_2] : memref<640x128xbf16, #tpu.memory_space<vmem>>, vector<128x128xbf16>
    %cst = arith.constant dense<0.000000e+00> : vector<8x128xf32>
    %2 = tpu.matmul %0, %1, %cst {dimension_numbers = #tpu.dot_dimension_numbers<[1], [0], [0], [1], [0, 0, 1, 1], [], []>} : vector<8x128xbf16>, vector<128x128xbf16>, vector<8x128xf32> -> vector<8x128xf32>
    %c0_3 = arith.constant 0 : index
    %c0_4 = arith.constant 0 : index
    %3 = vector.load %arg3[%c0_3, %c0_4] : memref<8x128xf32, #tpu.memory_space<vmem>>, vector<1x128xf32>
    %4 = vector.broadcast %3 : vector<1x128xf32> to vector<8x128xf32>
    %5 = arith.addf %2, %4 : vector<8x128xf32>
    %cst_5 = arith.constant 0.000000e+00 : f32
    %6 = vector.broadcast %cst_5 : f32 to vector<8x128xf32>
    %7 = arith.maximumf %5, %6 : vector<8x128xf32>
    %8 = arith.truncf %7 : vector<8x128xf32> to vector<8x128xbf16>
    %c128 = arith.constant 128 : index
    %c0_6 = arith.constant 0 : index
    %9 = vector.load %arg2[%c128, %c0_6] : memref<640x128xbf16, #tpu.memory_space<vmem>>, vector<128x128xbf16>
    %cst_7 = arith.constant dense<0.000000e+00> : vector<8x128xf32>
    %10 = tpu.matmul %8, %9, %cst_7 {dimension_numbers = #tpu.dot_dimension_numbers<[1], [0], [0], [1], [0, 0, 1, 1], [], []>} : vector<8x128xbf16>, vector<128x128xbf16>, vector<8x128xf32> -> vector<8x128xf32>
    %c1 = arith.constant 1 : index
    %c0_8 = arith.constant 0 : index
    %11 = vector.load %arg3[%c1, %c0_8] : memref<8x128xf32, #tpu.memory_space<vmem>>, vector<1x128xf32>
    %12 = vector.broadcast %11 : vector<1x128xf32> to vector<8x128xf32>
    %13 = arith.addf %10, %12 : vector<8x128xf32>
    %cst_9 = arith.constant 0.000000e+00 : f32
    %14 = vector.broadcast %cst_9 : f32 to vector<8x128xf32>
    %15 = arith.maximumf %13, %14 : vector<8x128xf32>
    %16 = arith.truncf %15 : vector<8x128xf32> to vector<8x128xbf16>
    %c256 = arith.constant 256 : index
    %c0_10 = arith.constant 0 : index
    %17 = vector.load %arg2[%c256, %c0_10] : memref<640x128xbf16, #tpu.memory_space<vmem>>, vector<128x128xbf16>
    %cst_11 = arith.constant dense<0.000000e+00> : vector<8x128xf32>
    %18 = tpu.matmul %16, %17, %cst_11 {dimension_numbers = #tpu.dot_dimension_numbers<[1], [0], [0], [1], [0, 0, 1, 1], [], []>} : vector<8x128xbf16>, vector<128x128xbf16>, vector<8x128xf32> -> vector<8x128xf32>
    %c2 = arith.constant 2 : index
    %c0_12 = arith.constant 0 : index
    %19 = vector.load %arg3[%c2, %c0_12] : memref<8x128xf32, #tpu.memory_space<vmem>>, vector<1x128xf32>
    %20 = vector.broadcast %19 : vector<1x128xf32> to vector<8x128xf32>
    %21 = arith.addf %18, %20 : vector<8x128xf32>
    %cst_13 = arith.constant 0.000000e+00 : f32
    %22 = vector.broadcast %cst_13 : f32 to vector<8x128xf32>
    %23 = arith.maximumf %21, %22 : vector<8x128xf32>
    %24 = arith.truncf %23 : vector<8x128xf32> to vector<8x128xbf16>
    %c384 = arith.constant 384 : index
    %c0_14 = arith.constant 0 : index
    %25 = vector.load %arg2[%c384, %c0_14] : memref<640x128xbf16, #tpu.memory_space<vmem>>, vector<128x128xbf16>
    %cst_15 = arith.constant dense<0.000000e+00> : vector<8x128xf32>
    %26 = tpu.matmul %24, %25, %cst_15 {dimension_numbers = #tpu.dot_dimension_numbers<[1], [0], [0], [1], [0, 0, 1, 1], [], []>} : vector<8x128xbf16>, vector<128x128xbf16>, vector<8x128xf32> -> vector<8x128xf32>
    %c3 = arith.constant 3 : index
    %c0_16 = arith.constant 0 : index
    %27 = vector.load %arg3[%c3, %c0_16] : memref<8x128xf32, #tpu.memory_space<vmem>>, vector<1x128xf32>
    %28 = vector.broadcast %27 : vector<1x128xf32> to vector<8x128xf32>
    %29 = arith.addf %26, %28 : vector<8x128xf32>
    %cst_17 = arith.constant 0.000000e+00 : f32
    %30 = vector.broadcast %cst_17 : f32 to vector<8x128xf32>
    %31 = arith.maximumf %29, %30 : vector<8x128xf32>
    %32 = arith.truncf %31 : vector<8x128xf32> to vector<8x128xbf16>
    %c512 = arith.constant 512 : index
    %c0_18 = arith.constant 0 : index
    %33 = vector.load %arg2[%c512, %c0_18] : memref<640x128xbf16, #tpu.memory_space<vmem>>, vector<128x128xbf16>
    %cst_19 = arith.constant dense<0.000000e+00> : vector<8x128xf32>
    %34 = tpu.matmul %32, %33, %cst_19 {dimension_numbers = #tpu.dot_dimension_numbers<[1], [0], [0], [1], [0, 0, 1, 1], [], []>} : vector<8x128xbf16>, vector<128x128xbf16>, vector<8x128xf32> -> vector<8x128xf32>
    %c4 = arith.constant 4 : index
    %c0_20 = arith.constant 0 : index
    %35 = vector.load %arg3[%c4, %c0_20] : memref<8x128xf32, #tpu.memory_space<vmem>>, vector<1x128xf32>
    %36 = vector.broadcast %35 : vector<1x128xf32> to vector<8x128xf32>
    %37 = arith.addf %34, %36 : vector<8x128xf32>
    %c0_21 = arith.constant 0 : index
    %c0_22 = arith.constant 0 : index
    %38 = vector.load %arg4[%c0_21, %c0_22] : memref<8x128xf32, #tpu.memory_space<vmem>>, vector<8x128xf32>
    tpu.vector_store %arg4[%c0_21, %c0_22], %37 {strides = array<i32>} : memref<8x128xf32, #tpu.memory_space<vmem>>, vector<8x128xf32>,
    return
  }
  func.func @transform_0(%arg0: i32) -> (i32, i32) {
    %c0_i32 = arith.constant 0 : i32
    %c0_i32_0 = arith.constant 0 : i32
    return %arg0, %c0_i32 : i32, i32
  }
  func.func @transform_1(%arg0: i32) -> (i32, i32) {
    %c0_i32 = arith.constant 0 : i32
    %c0_i32_0 = arith.constant 0 : i32
    %c0_i32_1 = arith.constant 0 : i32
    return %c0_i32, %c0_i32_0 : i32, i32
  }
  func.func @transform_2(%arg0: i32) -> (i32, i32) {
    %c0_i32 = arith.constant 0 : i32
    %c0_i32_0 = arith.constant 0 : i32
    %c0_i32_1 = arith.constant 0 : i32
    return %c0_i32, %c0_i32_0 : i32, i32
  }
  func.func @transform_3(%arg0: i32) -> (i32, i32) {
    %c0_i32 = arith.constant 0 : i32
    %c0_i32_0 = arith.constant 0 : i32
    return %arg0, %c0_i32 : i32, i32
  }
}

</mosaic_0001>

<llo_original>
// kernel: agent_network_fc_forward.1
$region0: #{agent_network_fc_forward.1}
  #allocation0 [shape = 'u32[]', space=smem, size = 0x4, offset = 0x4, fixed_abs, tag = 'smem constant byte address 0x4 - core index']
  #allocation1 [shape = 'u32[144,128]{1,0:T(1,128)}', space=vmem, size = 0x12000, scoped, tag = 'internal scratch']
  %s0 = inlined_call_operand.vmem [shape: bf16[8,128], index: 0, kind: input, shape index: {}]
  %s1 = inlined_call_operand.hbm [shape: bf16[640,128], index: 1, kind: input, shape index: {}]
  %s2 = inlined_call_operand.vmem [shape: f32[8,128], index: 2, kind: input, shape index: {}]
  %s3 = inlined_call_operand.vmem [shape: f32[8,128], index: 3, kind: output, shape index: {}]
  %s4 = sld [smem:[#allocation0]]
  $region26: #{agent_network_fc_forward.1} parent=0
    _
  %s6 = ssub.s32 1, %s4
  %s7 = scalar_select 0, %s6, %s4
  $region1: #{agent_network_fc_forward.1} parent=0
    #allocation2 [shape = 'u8[163840]{0}', space=vmem, size = 0x28000, scoped, tag = 'input window, operand 1, single buffered']
    #allocation3 [shape = 's32[1]{0}', space=sflag, size = 0x4, scoped, tag = 'scoped memory for agent_network_fc_forward.1']
    %8 = vsyncpa [#allocation3], 0
    // Predicated region
    $region2: #{agent_network_fc_forward.1} parent=1 // pred_check
      _
    $region3: #{agent_network_fc_forward.1} parent=1 // pred_check_branch
      %10 = sbr.rel (0) target = $region5
    $region4: #{agent_network_fc_forward.1} parent=1 // pred_region
      _
    $region5: #{agent_network_fc_forward.1} parent=1 // pred_fallthru
      _
    // Predicated region
    $region6: #{agent_network_fc_forward.1} parent=1 // pred_check
      _
    $region7: #{agent_network_fc_forward.1} parent=1 // pred_check_branch
      %12 = sbr.rel (0) target = $region9
    $region8: #{agent_network_fc_forward.1} parent=1 // pred_region
      %s14 = ssub.s32 5120, 5120
      %15 = vsyncadd [#allocation3], %s14
      %s16 = sshll.u32 [#allocation2], 4
      %s17 = int_to_ptr.vmem [resolvable:$true] %s16
      %22 = dma.hbm_to_vmem [thread:$0]  %s1, 5120, %s17, [#allocation3], 64, 64, 4
    $region9: #{agent_network_fc_forward.1} parent=1 // pred_fallthru
      _
    // Predicated region
    $region10: #{agent_network_fc_forward.1} parent=1 // pred_check
      _
    $region11: #{agent_network_fc_forward.1} parent=1 // pred_check_branch
      %24 = sbr.rel (0) target = $region13
    $region12: #{agent_network_fc_forward.1} parent=1 // pred_region
      _
    $region13: #{agent_network_fc_forward.1} parent=1 // pred_fallthru
      _
    // Predicated region
    $region14: #{agent_network_fc_forward.1} parent=1 // pred_check
      _
    $region15: #{agent_network_fc_forward.1} parent=1 // pred_check_branch
      %26 = sbr.rel (0) target = $region17
    $region16: #{agent_network_fc_forward.1} parent=1 // pred_region
      %27 = dma.done [#allocation3], 5120
    $region17: #{agent_network_fc_forward.1} parent=1 // pred_fallthru
      _
    %v29 = vld [vmem:[%s0] sm:$0xf]
    %v30 = vld [vmem:[#allocation2] sm:$0xf]
    %v31 = vld [vmem:[#allocation2 + $0x4] sm:$0xf]
    %v32 = vld [vmem:[#allocation2 + $0x8] sm:$0xf]
    %v33 = vld [vmem:[#allocation2 + $0xc] sm:$0xf]
    %v34 = vld [vmem:[#allocation2 + $0x10] sm:$0xf]
    %v35 = vld [vmem:[#allocation2 + $0x14] sm:$0xf]
    %v36 = vld [vmem:[#allocation2 + $0x18] sm:$0xf]
    %v37 = vld [vmem:[#allocation2 + $0x1c] sm:$0xf]
    %v38 = vld [vmem:[#allocation2 + $0x20] sm:$0xf]
    %v39 = vld [vmem:[#allocation2 + $0x24] sm:$0xf]
    %v40 = vld [vmem:[#allocation2 + $0x28] sm:$0xf]
    %v41 = vld [vmem:[#allocation2 + $0x2c] sm:$0xf]
    %v42 = vld [vmem:[#allocation2 + $0x30] sm:$0xf]
    %v43 = vld [vmem:[#allocation2 + $0x34] sm:$0xf]
    %v44 = vld [vmem:[#allocation2 + $0x38] sm:$0xf]
    %v45 = vld [vmem:[#allocation2 + $0x3c] sm:$0xf]
    %v46 = vld [vmem:[%s2] sm:$0x1]
    %v47 = vlaneseq
    %v48 = vshrl.u32 %v47, 7
    %v49 = vsub.s32 0, %v48
    %v50 = vrot.slane %v46, %v49
    %v67 = vunpack.c.l.b16 %v30
    %v68 = vunpack.c.l.b16 %v31
    %v69 = vunpack.c.l.b16 %v32
    %v70 = vunpack.c.l.b16 %v33
    %v71 = vunpack.c.l.b16 %v34
    %v72 = vunpack.c.l.b16 %v35
    %v73 = vunpack.c.l.b16 %v36
    %v74 = vunpack.c.l.b16 %v37
    %v75 = vunpack.c.l.b16 %v38
    %v76 = vunpack.c.l.b16 %v39
    %v77 = vunpack.c.l.b16 %v40
    %v78 = vunpack.c.l.b16 %v41
    %v79 = vunpack.c.l.b16 %v42
    %v80 = vunpack.c.l.b16 %v43
    %v81 = vunpack.c.l.b16 %v44
    %v82 = vunpack.c.l.b16 %v45
    %v83 = vpack.c.b16 %v68, %v67
    %v84 = vpack.c.b16 %v70, %v69
    %v85 = vpack.c.b16 %v72, %v71
    %v86 = vpack.c.b16 %v74, %v73
    %v87 = vpack.c.b16 %v76, %v75
    %v88 = vpack.c.b16 %v78, %v77
    %v89 = vpack.c.b16 %v80, %v79
    %v90 = vpack.c.b16 %v82, %v81
    %99 = vmatprep.subr.bf16.mxu0 0
    %100 = vmatpush1.bf16.msra.mxu0 %v83
    %101 = vmatprep.subr.bf16.mxu0 0
    %102 = vmatpush1.bf16.msra.mxu0 %v84
    %103 = vmatprep.subr.bf16.mxu0 0
    %104 = vmatpush1.bf16.msra.mxu0 %v85
    %105 = vmatprep.subr.bf16.mxu0 0
    %106 = vmatpush1.bf16.msra.mxu0 %v86
    %107 = vmatprep.subr.bf16.mxu0 0
    %108 = vmatpush1.bf16.msra.mxu0 %v87
    %109 = vmatprep.subr.bf16.mxu0 0
    %110 = vmatpush1.bf16.msra.mxu0 %v88
    %111 = vmatprep.subr.bf16.mxu0 0
    %112 = vmatpush1.bf16.msra.mxu0 %v89
    %113 = vmatprep.subr.bf16.mxu0 0
    %114 = vmatpush1.bf16.msra.mxu0 %v90
    %115 = vmatprep.subr.bf16.mxu0 0
    %116 = vmatpush1.bf16.msra.mxu0 0
    %117 = vmatprep.subr.bf16.mxu0 0
    %118 = vmatpush1.bf16.msra.mxu0 0
    %119 = vmatprep.subr.bf16.mxu0 0
    %120 = vmatpush1.bf16.msra.mxu0 0
    %121 = vmatprep.subr.bf16.mxu0 0
    %122 = vmatpush1.bf16.msra.mxu0 0
    %123 = vmatprep.subr.bf16.mxu0 0
    %124 = vmatpush1.bf16.msra.mxu0 0
    %125 = vmatprep.subr.bf16.mxu0 0
    %126 = vmatpush1.bf16.msra.mxu0 0
    %127 = vmatprep.subr.bf16.mxu0 0
    %128 = vmatpush1.bf16.msra.mxu0 0
    %129 = vmatprep.subr.bf16.mxu0 0
    %130 = vmatpush1.bf16.msra.mxu0 0
    %131 = vmatprep.mubr.bf16.mxu0 0
    %132 = vmatmul.mubr.bf16.gmra.mrb[0].mxu0 %v29
    %v133 = vpop.f32.mrb[0].mxu0
    %v134 = vadd.f32 %v50, %v133
    %v135 = vpop.f32.mrb[0].mxu0
    %v136 = vpop.f32.mrb[0].mxu0
    %v137 = vpop.f32.mrb[0].mxu0
    %138 = vdwg.mxu0
    %v139 = vmax.f32 %v134, 0.0
    %v140 = vpack.c.bf16 %v139, %v139
    %v141 = vld [vmem:[#allocation2 + $0x40] sm:$0xf]
    %v142 = vld [vmem:[#allocation2 + $0x44] sm:$0xf]
    %v143 = vld [vmem:[#allocation2 + $0x48] sm:$0xf]
    %v144 = vld [vmem:[#allocation2 + $0x4c] sm:$0xf]
    %v145 = vld [vmem:[#allocation2 + $0x50] sm:$0xf]
    %v146 = vld [vmem:[#allocation2 + $0x54] sm:$0xf]
    %v147 = vld [vmem:[#allocation2 + $0x58] sm:$0xf]
    %v148 = vld [vmem:[#allocation2 + $0x5c] sm:$0xf]
    %v149 = vld [vmem:[#allocation2 + $0x60] sm:$0xf]
    %v150 = vld [vmem:[#allocation2 + $0x64] sm:$0xf]
    %v151 = vld [vmem:[#allocation2 + $0x68] sm:$0xf]
    %v152 = vld [vmem:[#allocation2 + $0x6c] sm:$0xf]
    %v153 = vld [vmem:[#allocation2 + $0x70] sm:$0xf]
    %v154 = vld [vmem:[#allocation2 + $0x74] sm:$0xf]
    %v155 = vld [vmem:[#allocation2 + $0x78] sm:$0xf]
    %v156 = vld [vmem:[#allocation2 + $0x7c] sm:$0xf]
    %v157 = vld [vmem:[%s2 + $0x1] sm:$0x1]
    %v158 = vlaneseq
    %v159 = vshrl.u32 %v158, 7
    %v160 = vsub.s32 0, %v159
    %v161 = vrot.slane %v157, %v160
    %v178 = vunpack.c.l.b16 %v141
    %v179 = vunpack.c.l.b16 %v142
    %v180 = vunpack.c.l.b16 %v143
    %v181 = vunpack.c.l.b16 %v144
    %v182 = vunpack.c.l.b16 %v145
    %v183 = vunpack.c.l.b16 %v146
    %v184 = vunpack.c.l.b16 %v147
    %v185 = vunpack.c.l.b16 %v148
    %v186 = vunpack.c.l.b16 %v149
    %v187 = vunpack.c.l.b16 %v150
    %v188 = vunpack.c.l.b16 %v151
    %v189 = vunpack.c.l.b16 %v152
    %v190 = vunpack.c.l.b16 %v153
    %v191 = vunpack.c.l.b16 %v154
    %v192 = vunpack.c.l.b16 %v155
    %v193 = vunpack.c.l.b16 %v156
    %v194 = vpack.c.b16 %v179, %v178
    %v195 = vpack.c.b16 %v181, %v180
    %v196 = vpack.c.b16 %v183, %v182
    %v197 = vpack.c.b16 %v185, %v184
    %v198 = vpack.c.b16 %v187, %v186
    %v199 = vpack.c.b16 %v189, %v188
    %v200 = vpack.c.b16 %v191, %v190
    %v201 = vpack.c.b16 %v193, %v192
    %210 = vmatprep.subr.bf16.mxu0 0
    %211 = vmatpush1.bf16.msra.mxu0 %v194
    %212 = vmatprep.subr.bf16.mxu0 0
    %213 = vmatpush1.bf16.msra.mxu0 %v195
    %214 = vmatprep.subr.bf16.mxu0 0
    %215 = vmatpush1.bf16.msra.mxu0 %v196
    %216 = vmatprep.subr.bf16.mxu0 0
    %217 = vmatpush1.bf16.msra.mxu0 %v197
    %218 = vmatprep.subr.bf16.mxu0 0
    %219 = vmatpush1.bf16.msra.mxu0 %v198
    %220 = vmatprep.subr.bf16.mxu0 0
    %221 = vmatpush1.bf16.msra.mxu0 %v199
    %222 = vmatprep.subr.bf16.mxu0 0
    %223 = vmatpush1.bf16.msra.mxu0 %v200
    %224 = vmatprep.subr.bf16.mxu0 0
    %225 = vmatpush1.bf16.msra.mxu0 %v201
    %226 = vmatprep.subr.bf16.mxu0 0
    %227 = vmatpush1.bf16.msra.mxu0 0
    %228 = vmatprep.subr.bf16.mxu0 0
    %229 = vmatpush1.bf16.msra.mxu0 0
    %230 = vmatprep.subr.bf16.mxu0 0
    %231 = vmatpush1.bf16.msra.mxu0 0
    %232 = vmatprep.subr.bf16.mxu0 0
    %233 = vmatpush1.bf16.msra.mxu0 0
    %234 = vmatprep.subr.bf16.mxu0 0
    %235 = vmatpush1.bf16.msra.mxu0 0
    %236 = vmatprep.subr.bf16.mxu0 0
    %237 = vmatpush1.bf16.msra.mxu0 0
    %238 = vmatprep.subr.bf16.mxu0 0
    %239 = vmatpush1.bf16.msra.mxu0 0
    %240 = vmatprep.subr.bf16.mxu0 0
    %241 = vmatpush1.bf16.msra.mxu0 0
    %242 = vmatprep.mubr.bf16.mxu0 0
    %243 = vmatmul.mubr.bf16.gmra.mrb[0].mxu0 %v140
    %v244 = vpop.f32.mrb[0].mxu0
    %v245 = vadd.f32 %v161, %v244
    %v246 = vpop.f32.mrb[0].mxu0
    %v247 = vpop.f32.mrb[0].mxu0
    %v248 = vpop.f32.mrb[0].mxu0
    %249 = vdwg.mxu0
    %v250 = vmax.f32 %v245, 0.0
    %v251 = vpack.c.bf16 %v250, %v250
    %v252 = vld [vmem:[#allocation2 + $0x80] sm:$0xf]
    %v253 = vld [vmem:[#allocation2 + $0x84] sm:$0xf]
    %v254 = vld [vmem:[#allocation2 + $0x88] sm:$0xf]
    %v255 = vld [vmem:[#allocation2 + $0x8c] sm:$0xf]
    %v256 = vld [vmem:[#allocation2 + $0x90] sm:$0xf]
    %v257 = vld [vmem:[#allocation2 + $0x94] sm:$0xf]
    %v258 = vld [vmem:[#allocation2 + $0x98] sm:$0xf]
    %v259 = vld [vmem:[#allocation2 + $0x9c] sm:$0xf]
    %v260 = vld [vmem:[#allocation2 + $0xa0] sm:$0xf]
    %v261 = vld [vmem:[#allocation2 + $0xa4] sm:$0xf]
    %v262 = vld [vmem:[#allocation2 + $0xa8] sm:$0xf]
    %v263 = vld [vmem:[#allocation2 + $0xac] sm:$0xf]
    %v264 = vld [vmem:[#allocation2 + $0xb0] sm:$0xf]
    %v265 = vld [vmem:[#allocation2 + $0xb4] sm:$0xf]
    %v266 = vld [vmem:[#allocation2 + $0xb8] sm:$0xf]
    %v267 = vld [vmem:[#allocation2 + $0xbc] sm:$0xf]
    %v268 = vld [vmem:[%s2 + $0x2] sm:$0x1]
    %v269 = vlaneseq
    %v270 = vshrl.u32 %v269, 7
    %v271 = vsub.s32 0, %v270
    %v272 = vrot.slane %v268, %v271
    %v289 = vunpack.c.l.b16 %v252
    %v290 = vunpack.c.l.b16 %v253
    %v291 = vunpack.c.l.b16 %v254
    %v292 = vunpack.c.l.b16 %v255
    %v293 = vunpack.c.l.b16 %v256
    %v294 = vunpack.c.l.b16 %v257
    %v295 = vunpack.c.l.b16 %v258
    %v296 = vunpack.c.l.b16 %v259
    %v297 = vunpack.c.l.b16 %v260
    %v298 = vunpack.c.l.b16 %v261
    %v299 = vunpack.c.l.b16 %v262
    %v300 = vunpack.c.l.b16 %v263
    %v301 = vunpack.c.l.b16 %v264
    %v302 = vunpack.c.l.b16 %v265
    %v303 = vunpack.c.l.b16 %v266
    %v304 = vunpack.c.l.b16 %v267
    %v305 = vpack.c.b16 %v290, %v289
    %v306 = vpack.c.b16 %v292, %v291
    %v307 = vpack.c.b16 %v294, %v293
    %v308 = vpack.c.b16 %v296, %v295
    %v309 = vpack.c.b16 %v298, %v297
    %v310 = vpack.c.b16 %v300, %v299
    %v311 = vpack.c.b16 %v302, %v301
    %v312 = vpack.c.b16 %v304, %v303
    %321 = vmatprep.subr.bf16.mxu0 0
    %322 = vmatpush1.bf16.msra.mxu0 %v305
    %323 = vmatprep.subr.bf16.mxu0 0
    %324 = vmatpush1.bf16.msra.mxu0 %v306
    %325 = vmatprep.subr.bf16.mxu0 0
    %326 = vmatpush1.bf16.msra.mxu0 %v307
    %327 = vmatprep.subr.bf16.mxu0 0
    %328 = vmatpush1.bf16.msra.mxu0 %v308
    %329 = vmatprep.subr.bf16.mxu0 0
    %330 = vmatpush1.bf16.msra.mxu0 %v309
    %331 = vmatprep.subr.bf16.mxu0 0
    %332 = vmatpush1.bf16.msra.mxu0 %v310
    %333 = vmatprep.subr.bf16.mxu0 0
    %334 = vmatpush1.bf16.msra.mxu0 %v311
    %335 = vmatprep.subr.bf16.mxu0 0
    %336 = vmatpush1.bf16.msra.mxu0 %v312
    %337 = vmatprep.subr.bf16.mxu0 0
    %338 = vmatpush1.bf16.msra.mxu0 0
    %339 = vmatprep.subr.bf16.mxu0 0
    %340 = vmatpush1.bf16.msra.mxu0 0
    %341 = vmatprep.subr.bf16.mxu0 0
    %342 = vmatpush1.bf16.msra.mxu0 0
    %343 = vmatprep.subr.bf16.mxu0 0
    %344 = vmatpush1.bf16.msra.mxu0 0
    %345 = vmatprep.subr.bf16.mxu0 0
    %346 = vmatpush1.bf16.msra.mxu0 0
    %347 = vmatprep.subr.bf16.mxu0 0
    %348 = vmatpush1.bf16.msra.mxu0 0
    %349 = vmatprep.subr.bf16.mxu0 0
    %350 = vmatpush1.bf16.msra.mxu0 0
    %351 = vmatprep.subr.bf16.mxu0 0
    %352 = vmatpush1.bf16.msra.mxu0 0
    %353 = vmatprep.mubr.bf16.mxu0 0
    %354 = vmatmul.mubr.bf16.gmra.mrb[0].mxu0 %v251
    %v355 = vpop.f32.mrb[0].mxu0
    %v356 = vadd.f32 %v272, %v355
    %v357 = vpop.f32.mrb[0].mxu0
    %v358 = vpop.f32.mrb[0].mxu0
    %v359 = vpop.f32.mrb[0].mxu0
    %360 = vdwg.mxu0
    %v361 = vmax.f32 %v356, 0.0
    %v362 = vpack.c.bf16 %v361, %v361
    %v363 = vld [vmem:[#allocation2 + $0xc0] sm:$0xf]
    %v364 = vld [vmem:[#allocation2 + $0xc4] sm:$0xf]
    %v365 = vld [vmem:[#allocation2 + $0xc8] sm:$0xf]
    %v366 = vld [vmem:[#allocation2 + $0xcc] sm:$0xf]
    %v367 = vld [vmem:[#allocation2 + $0xd0] sm:$0xf]
    %v368 = vld [vmem:[#allocation2 + $0xd4] sm:$0xf]
    %v369 = vld [vmem:[#allocation2 + $0xd8] sm:$0xf]
    %v370 = vld [vmem:[#allocation2 + $0xdc] sm:$0xf]
    %v371 = vld [vmem:[#allocation2 + $0xe0] sm:$0xf]
    %v372 = vld [vmem:[#allocation2 + $0xe4] sm:$0xf]
    %v373 = vld [vmem:[#allocation2 + $0xe8] sm:$0xf]
    %v374 = vld [vmem:[#allocation2 + $0xec] sm:$0xf]
    %v375 = vld [vmem:[#allocation2 + $0xf0] sm:$0xf]
    %v376 = vld [vmem:[#allocation2 + $0xf4] sm:$0xf]
    %v377 = vld [vmem:[#allocation2 + $0xf8] sm:$0xf]
    %v378 = vld [vmem:[#allocation2 + $0xfc] sm:$0xf]
    %v379 = vld [vmem:[%s2 + $0x3] sm:$0x1]
    %v380 = vlaneseq
    %v381 = vshrl.u32 %v380, 7
    %v382 = vsub.s32 0, %v381
    %v383 = vrot.slane %v379, %v382
    %v400 = vunpack.c.l.b16 %v363
    %v401 = vunpack.c.l.b16 %v364
    %v402 = vunpack.c.l.b16 %v365
    %v403 = vunpack.c.l.b16 %v366
    %v404 = vunpack.c.l.b16 %v367
    %v405 = vunpack.c.l.b16 %v368
    %v406 = vunpack.c.l.b16 %v369
    %v407 = vunpack.c.l.b16 %v370
    %v408 = vunpack.c.l.b16 %v371
    %v409 = vunpack.c.l.b16 %v372
    %v410 = vunpack.c.l.b16 %v373
    %v411 = vunpack.c.l.b16 %v374
    %v412 = vunpack.c.l.b16 %v375
    %v413 = vunpack.c.l.b16 %v376
    %v414 = vunpack.c.l.b16 %v377
    %v415 = vunpack.c.l.b16 %v378
    %v416 = vpack.c.b16 %v401, %v400
    %v417 = vpack.c.b16 %v403, %v402
    %v418 = vpack.c.b16 %v405, %v404
    %v419 = vpack.c.b16 %v407, %v406
    %v420 = vpack.c.b16 %v409, %v408
    %v421 = vpack.c.b16 %v411, %v410
    %v422 = vpack.c.b16 %v413, %v412
    %v423 = vpack.c.b16 %v415, %v414
    %432 = vmatprep.subr.bf16.mxu0 0
    %433 = vmatpush1.bf16.msra.mxu0 %v416
    %434 = vmatprep.subr.bf16.mxu0 0
    %435 = vmatpush1.bf16.msra.mxu0 %v417
    %436 = vmatprep.subr.bf16.mxu0 0
    %437 = vmatpush1.bf16.msra.mxu0 %v418
    %438 = vmatprep.subr.bf16.mxu0 0
    %439 = vmatpush1.bf16.msra.mxu0 %v419
    %440 = vmatprep.subr.bf16.mxu0 0
    %441 = vmatpush1.bf16.msra.mxu0 %v420
    %442 = vmatprep.subr.bf16.mxu0 0
    %443 = vmatpush1.bf16.msra.mxu0 %v421
    %444 = vmatprep.subr.bf16.mxu0 0
    %445 = vmatpush1.bf16.msra.mxu0 %v422
    %446 = vmatprep.subr.bf16.mxu0 0
    %447 = vmatpush1.bf16.msra.mxu0 %v423
    %448 = vmatprep.subr.bf16.mxu0 0
    %449 = vmatpush1.bf16.msra.mxu0 0
    %450 = vmatprep.subr.bf16.mxu0 0
    %451 = vmatpush1.bf16.msra.mxu0 0
    %452 = vmatprep.subr.bf16.mxu0 0
    %453 = vmatpush1.bf16.msra.mxu0 0
    %454 = vmatprep.subr.bf16.mxu0 0
    %455 = vmatpush1.bf16.msra.mxu0 0
    %456 = vmatprep.subr.bf16.mxu0 0
    %457 = vmatpush1.bf16.msra.mxu0 0
    %458 = vmatprep.subr.bf16.mxu0 0
    %459 = vmatpush1.bf16.msra.mxu0 0
    %460 = vmatprep.subr.bf16.mxu0 0
    %461 = vmatpush1.bf16.msra.mxu0 0
    %462 = vmatprep.subr.bf16.mxu0 0
    %463 = vmatpush1.bf16.msra.mxu0 0
    %464 = vmatprep.mubr.bf16.mxu0 0
    %465 = vmatmul.mubr.bf16.gmra.mrb[0].mxu0 %v362
    %v466 = vpop.f32.mrb[0].mxu0
    %v467 = vadd.f32 %v383, %v466
    %v468 = vpop.f32.mrb[0].mxu0
    %v469 = vpop.f32.mrb[0].mxu0
    %v470 = vpop.f32.mrb[0].mxu0
    %471 = vdwg.mxu0
    %v472 = vmax.f32 %v467, 0.0
    %v473 = vpack.c.bf16 %v472, %v472
    %v474 = vld [vmem:[#allocation2 + $0x100] sm:$0xf]
    %v475 = vld [vmem:[#allocation2 + $0x104] sm:$0xf]
    %v476 = vld [vmem:[#allocation2 + $0x108] sm:$0xf]
    %v477 = vld [vmem:[#allocation2 + $0x10c] sm:$0xf]
    %v478 = vld [vmem:[#allocation2 + $0x110] sm:$0xf]
    %v479 = vld [vmem:[#allocation2 + $0x114] sm:$0xf]
    %v480 = vld [vmem:[#allocation2 + $0x118] sm:$0xf]
    %v481 = vld [vmem:[#allocation2 + $0x11c] sm:$0xf]
    %v482 = vld [vmem:[#allocation2 + $0x120] sm:$0xf]
    %v483 = vld [vmem:[#allocation2 + $0x124] sm:$0xf]
    %v484 = vld [vmem:[#allocation2 + $0x128] sm:$0xf]
    %v485 = vld [vmem:[#allocation2 + $0x12c] sm:$0xf]
    %v486 = vld [vmem:[#allocation2 + $0x130] sm:$0xf]
    %v487 = vld [vmem:[#allocation2 + $0x134] sm:$0xf]
    %v488 = vld [vmem:[#allocation2 + $0x138] sm:$0xf]
    %v489 = vld [vmem:[#allocation2 + $0x13c] sm:$0xf]
    %v490 = vld [vmem:[%s2 + $0x4] sm:$0x1]
    %v491 = vlaneseq
    %v492 = vshrl.u32 %v491, 7
    %v493 = vsub.s32 0, %v492
    %v494 = vrot.slane %v490, %v493
    %v511 = vunpack.c.l.b16 %v474
    %v512 = vunpack.c.l.b16 %v475
    %v513 = vunpack.c.l.b16 %v476
    %v514 = vunpack.c.l.b16 %v477
    %v515 = vunpack.c.l.b16 %v478
    %v516 = vunpack.c.l.b16 %v479
    %v517 = vunpack.c.l.b16 %v480
    %v518 = vunpack.c.l.b16 %v481
    %v519 = vunpack.c.l.b16 %v482
    %v520 = vunpack.c.l.b16 %v483
    %v521 = vunpack.c.l.b16 %v484
    %v522 = vunpack.c.l.b16 %v485
    %v523 = vunpack.c.l.b16 %v486
    %v524 = vunpack.c.l.b16 %v487
    %v525 = vunpack.c.l.b16 %v488
    %v526 = vunpack.c.l.b16 %v489
    %v527 = vpack.c.b16 %v512, %v511
    %v528 = vpack.c.b16 %v514, %v513
    %v529 = vpack.c.b16 %v516, %v515
    %v530 = vpack.c.b16 %v518, %v517
    %v531 = vpack.c.b16 %v520, %v519
    %v532 = vpack.c.b16 %v522, %v521
    %v533 = vpack.c.b16 %v524, %v523
    %v534 = vpack.c.b16 %v526, %v525
    %543 = vmatprep.subr.bf16.mxu0 0
    %544 = vmatpush1.bf16.msra.mxu0 %v527
    %545 = vmatprep.subr.bf16.mxu0 0
    %546 = vmatpush1.bf16.msra.mxu0 %v528
    %547 = vmatprep.subr.bf16.mxu0 0
    %548 = vmatpush1.bf16.msra.mxu0 %v529
    %549 = vmatprep.subr.bf16.mxu0 0
    %550 = vmatpush1.bf16.msra.mxu0 %v530
    %551 = vmatprep.subr.bf16.mxu0 0
    %552 = vmatpush1.bf16.msra.mxu0 %v531
    %553 = vmatprep.subr.bf16.mxu0 0
    %554 = vmatpush1.bf16.msra.mxu0 %v532
    %555 = vmatprep.subr.bf16.mxu0 0
    %556 = vmatpush1.bf16.msra.mxu0 %v533
    %557 = vmatprep.subr.bf16.mxu0 0
    %558 = vmatpush1.bf16.msra.mxu0 %v534
    %559 = vmatprep.subr.bf16.mxu0 0
    %560 = vmatpush1.bf16.msra.mxu0 0
    %561 = vmatprep.subr.bf16.mxu0 0
    %562 = vmatpush1.bf16.msra.mxu0 0
    %563 = vmatprep.subr.bf16.mxu0 0
    %564 = vmatpush1.bf16.msra.mxu0 0
    %565 = vmatprep.subr.bf16.mxu0 0
    %566 = vmatpush1.bf16.msra.mxu0 0
    %567 = vmatprep.subr.bf16.mxu0 0
    %568 = vmatpush1.bf16.msra.mxu0 0
    %569 = vmatprep.subr.bf16.mxu0 0
    %570 = vmatpush1.bf16.msra.mxu0 0
    %571 = vmatprep.subr.bf16.mxu0 0
    %572 = vmatpush1.bf16.msra.mxu0 0
    %573 = vmatprep.subr.bf16.mxu0 0
    %574 = vmatpush1.bf16.msra.mxu0 0
    %575 = vmatprep.mubr.bf16.mxu0 0
    %576 = vmatmul.mubr.bf16.gmra.mrb[0].mxu0 %v473
    %v577 = vpop.f32.mrb[0].mxu0
    %v578 = vadd.f32 %v494, %v577
    %v579 = vpop.f32.mrb[0].mxu0
    %v580 = vpop.f32.mrb[0].mxu0
    %v581 = vpop.f32.mrb[0].mxu0
    %582 = vdwg.mxu0
    %583 = vst [vmem:[%s3] sm:$0xff] %v578
    // Predicated region
    $region18: #{agent_network_fc_forward.1} parent=1 // pred_check
      _
    $region19: #{agent_network_fc_forward.1} parent=1 // pred_check_branch
      %585 = sbr.rel (0) target = $region21
    $region20: #{agent_network_fc_forward.1} parent=1 // pred_region
      _
    $region21: #{agent_network_fc_forward.1} parent=1 // pred_fallthru
      _
    // Predicated region
    $region22: #{agent_network_fc_forward.1} parent=1 // pred_check
      _
    $region23: #{agent_network_fc_forward.1} parent=1 // pred_check_branch
      %587 = sbr.rel (0) target = $region25
    $region24: #{agent_network_fc_forward.1} parent=1 // pred_region
      _
    $region25: #{agent_network_fc_forward.1} parent=1 // pred_fallthru
      _
    %588 = vsyncpa [#allocation3], 1

</llo_original>
